<compile_context>
chip_gen: v5e
topology: v5e:2x2
jax: 0.10.0
libtpu: 0.0.40
codegen_flags: <defaults>
</compile_context>

<pallas_src>
import functools

import jax
import jax.numpy as jnp
from jax import lax
from jax.experimental import pallas as pl
from jax.experimental.pallas import tpu as pltpu


LANE = 128
NEG_INF = jnp.float32(-1e30)
# keep S fully VMEM-resident in the aggregation when its bf16 copy is <= this
S_RESIDENT_BYTES = 4 * 1024 * 1024
# > v5e's 16 MiB scoped default, still leaves headroom on v7x (64 MiB physical)
VMEM_LIMIT_BYTES = 48 * 1024 * 1024


def _round_up(x, m):
    return (x + m - 1) // m * m


def _cparams(semantics):
    return pltpu.CompilerParams(
        dimension_semantics=semantics,
        vmem_limit_bytes=VMEM_LIMIT_BYTES,
    )


def _tile_and_pad(n, block):
    """Square node-tile size (multiple of 128) and padded node count."""
    block = max(LANE, _round_up(block, LANE))
    n128 = _round_up(n, LANE)
    t = min(block, n128)
    if n128 >= 2 * LANE:
        # keep >= 2 row tiles so both v7x TensorCores have work on the
        # "parallel" axis (no effect on single-TC v5e/v6e)
        t = min(t, _round_up(n128 // 2, LANE))
    t = max(t, LANE)
    n_pad = _round_up(n128, t)
    return t, n_pad


# --------------------------------------------------------------------------
# kernels
# --------------------------------------------------------------------------

def degree_kernel(adj_ref, d_ref):
    # d = (rowsum(adj) + 1)^(-1/2); the +1 folds the self-loop (adj + I)
    # without materializing it.  grid = (row tile i, reduction tile k);
    # the (t,1) f32 output block is the accumulator (constant over k).
    k = pl.program_id(1)

    @pl.when(k == 0)
    def _():
        d_ref[...] = jnp.ones_like(d_ref)          # the +1 self-loop term

    d_ref[...] += jnp.sum(adj_ref[...].astype(jnp.float32), axis=1,
                          keepdims=True)

    @pl.when(k == pl.num_programs(1) - 1)
    def _():
        d_ref[...] = lax.rsqrt(d_ref[...])         # rowsum + 1 >= 1, no guard


def support_kernel(x_ref, w_ref, d_ref, s_ref):
    # S = D^{-1/2} (X @ W), stored bf16 (it is re-read by the aggregation).
    x = x_ref[...].astype(jnp.bfloat16)            # no-op when already bf16
    s = jnp.dot(x, w_ref[...], preferred_element_type=jnp.float32)
    s_ref[...] = (d_ref[...] * s).astype(s_ref.dtype)


def aggregate_kernel(adj_ref, s_ref, d_ref, b_ref, o_ref, *,
                     t, s_resident, activation):
    # o = act( D^{-1/2} (A + I) S + b ),  S already scaled by D^{-1/2}.
    # grid = (row tiles i [parallel], reduction tiles k [arbitrary]);
    # the f32 output block is the accumulator (constant over k).
    i = pl.program_id(0)
    k = pl.program_id(1)

    @pl.when(k == 0)
    def _():
        o_ref[...] = jnp.zeros_like(o_ref)

    if s_resident:
        # S is fully VMEM-resident; slice the k-th row tile in-kernel.
        row0 = pl.multiple_of(k * t, t)
        s = s_ref[pl.ds(row0, t), :]
    else:
        s = s_ref[...]                             # (t, F) bf16 streamed tile

    # bf16 MXU matmul with f32 accumulation (binary adj -> bf16 is lossless).
    o_ref[...] += jnp.dot(adj_ref[...], s, preferred_element_type=jnp.float32)

    # self-loop contribution (the +I term), diagonal block only (square tiles).
    @pl.when(k == i)
    def _():
        o_ref[...] += s.astype(jnp.float32)

    @pl.when(k == pl.num_programs(1) - 1)
    def _():
        z = d_ref[...] * o_ref[...] + b_ref[...]
        if activation == "relu":
            o_ref[...] = jnp.maximum(z, jnp.float32(0.0))
        else:  # softmax over the lane-dense, padded class axis
            z = z - jnp.max(z, axis=1, keepdims=True)
            e = jnp.exp(z)
            o_ref[...] = e * pl.reciprocal(jnp.sum(e, axis=1, keepdims=True),
                                           approx=True)


# --------------------------------------------------------------------------
# wrapper
# --------------------------------------------------------------------------

def precompute_adj(adj, *, block=256):
    """Pad/cast adj to bf16 tiles and compute d = (rowsum(adj)+1)^(-1/2).

    For a static graph (the normal GCN case) call this once and reuse the
    result across forwards; it is the only per-call work that streams the
    full n^2 adjacency for preprocessing.
    """
    n = adj.shape[0]
    t, n_pad = _tile_and_pad(n, block)
    # Padded adj rows & cols are all-zero so they never perturb real rows.
    adj_p = jnp.zeros((n_pad, n_pad), jnp.bfloat16).at[:n, :n].set(
        adj.astype(jnp.bfloat16))
    num_t = n_pad // t
    d = pl.pallas_call(
        degree_kernel,
        grid=(num_t, num_t),
        in_specs=[pl.BlockSpec((t, t), lambda i, k: (i, k))],
        out_specs=pl.BlockSpec((t, 1), lambda i, k: (i, 0)),
        out_shape=jax.ShapeDtypeStruct((n_pad, 1), jnp.float32),
        compiler_params=_cparams(("parallel", "arbitrary")),
    )(adj_p)
    return adj_p, d, t


def _support(feat, w, d, t):
    n_pad, f_in = feat.shape
    f_out = w.shape[1]
    return pl.pallas_call(
        support_kernel,
        grid=(n_pad // t,),
        in_specs=[
            pl.BlockSpec((t, f_in), lambda i: (i, 0)),
            pl.BlockSpec((f_in, f_out), lambda i: (0, 0)),
            pl.BlockSpec((t, 1), lambda i: (i, 0)),
        ],
        out_specs=pl.BlockSpec((t, f_out), lambda i: (i, 0)),
        out_shape=jax.ShapeDtypeStruct((n_pad, f_out), jnp.bfloat16),
        compiler_params=_cparams(("parallel",)),
    )(feat, w, d)


def _aggregate(adj_p, s, d, b, t, activation):
    # TODO(synk): for realistic sparse graphs, a scalar-prefetched block-sparse
    # adjacency path (PrefetchScalarGridSpec + data-dependent index_maps) would
    # skip empty (i,k) tiles entirely; dense path only here.
    n_pad = adj_p.shape[0]
    f_dim = s.shape[1]
    num_t = n_pad // t
    s_resident = (n_pad * f_dim * 2) <= S_RESIDENT_BYTES
    if s_resident:
        s_spec = pl.BlockSpec((n_pad, f_dim), lambda i, k: (0, 0))
    else:
        s_spec = pl.BlockSpec((t, f_dim), lambda i, k: (k, 0))
    return pl.pallas_call(
        functools.partial(aggregate_kernel, t=t, s_resident=s_resident,
                          activation=activation),
        grid=(num_t, num_t),
        in_specs=[
            pl.BlockSpec((t, t), lambda i, k: (i, k)),      # adj tile (bf16)
            s_spec,                                         # scaled support (bf16)
            pl.BlockSpec((t, 1), lambda i, k: (i, 0)),      # d, rows i
            pl.BlockSpec((1, f_dim), lambda i, k: (0, 0)),  # bias
        ],
        out_specs=pl.BlockSpec((t, f_dim), lambda i, k: (i, 0)),
        out_shape=jax.ShapeDtypeStruct((n_pad, f_dim), jnp.float32),
        compiler_params=_cparams(("parallel", "arbitrary")),
    )(adj_p, s, d, b)


def gcn_forward(x, adj, w1, b1, w2, b2, *, block=256, pre=None):
    """Fused-per-layer Pallas GCN forward (eval mode)."""
    n, nfeat = x.shape
    nhid = w1.shape[1]
    nclass = w2.shape[1]
    f32, bf16 = jnp.float32, jnp.bfloat16

    if pre is None:
        pre = precompute_adj(adj, block=block)
    adj_p, d, t = pre
    n_pad = adj_p.shape[0]

    f_in = _round_up(nfeat, LANE)
    f_hid = _round_up(nhid, LANE)
    f_out = _round_up(nclass, LANE)

    # zero-pad features / weights (bf16 for the MXU); padded node outputs are
    # sliced off at the end.
    x_p = jnp.zeros((n_pad, f_in), bf16).at[:n, :nfeat].set(x.astype(bf16))
    w1_p = jnp.zeros((f_in, f_hid), bf16).at[:nfeat, :nhid].set(w1.astype(bf16))
    b1_p = jnp.zeros((1, f_hid), f32).at[:, :nhid].set(
        b1.reshape(1, -1).astype(f32))
    w2_p = jnp.zeros((f_hid, f_out), bf16).at[:nhid, :nclass].set(w2.astype(bf16))
    # padded class logits get a -inf-like bias so the softmax ignores them
    b2_p = jnp.full((1, f_out), NEG_INF, f32).at[:, :nclass].set(
        b2.reshape(1, -1).astype(f32))

    # layer 1:  h = relu(adj_norm @ (x W1) + b1)
    s1 = _support(x_p, w1_p, d, t)
    h = _aggregate(adj_p, s1, d, b1_p, t, "relu")
    # TODO(synk): F.dropout between the layers is identity in eval mode; the
    # training-mode random mask (pltpu.prng_random_bits) is not implemented.
    # layer 2:  out = softmax(adj_norm @ (h W2) + b2, axis=1)
    s2 = _support(h, w2_p, d, t)
    out = _aggregate(adj_p, s2, d, b2_p, t, "softmax")

    return out[:n, :nclass]


# --------------------------------------------------------------------------
# pure-JAX reference (f32)
# --------------------------------------------------------------------------

def gcn_reference(x, adj, w1, b1, w2, b2):
    n = adj.shape[0]
    adj_hat = adj + jnp.eye(n, dtype=adj.dtype)
    rowsum = adj_hat.sum(axis=1, keepdims=True)
    dinv = 1.0 / jnp.sqrt(rowsum)
    adj_norm = dinv * adj_hat * dinv.reshape(1, n)
    h = jnp.maximum(adj_norm @ (x @ w1) + b1, 0.0)
    z = adj_norm @ (h @ w2) + b2
    return jax.nn.softmax(z, axis=1)


def init_gc_params(key, in_features, out_features):
    # GraphConvolution.reset_parameters: uniform(-stdv, stdv), stdv = 1/sqrt(out).
    stdv = 1.0 / (out_features ** 0.5)
    kw, kb = jax.random.split(key)
    w = jax.random.uniform(kw, (in_features, out_features), jnp.float32, -stdv, stdv)
    b = jax.random.uniform(kb, (1, out_features), jnp.float32, -stdv, stdv)
    return w, b


if __name__ == "__main__":
    # Small but non-aligned shapes: exercises node padding (300 -> 512 with
    # two 256-row tiles), feature/class lane padding (48/16/7 -> 128) and a
    # 2x2 tiled aggregation / degree grid with VMEM-resident support S.
    N, nfeat, nhid, nclass = 300, 48, 16, 7

    key = jax.random.PRNGKey(0)
    k_adj, k_x, k_g1, k_g2 = jax.random.split(key, 4)

    # symmetric binary adjacency, no self-loops (added inside the kernel math)
    a = (jax.random.uniform(k_adj, (N, N)) > 0.9).astype(jnp.float32)
    adj = jnp.maximum(a, a.T)
    adj = adj * (1.0 - jnp.eye(N, dtype=jnp.float32))

    x = jax.random.normal(k_x, (N, nfeat), jnp.float32)
    w1, b1 = init_gc_params(k_g1, nfeat, nhid)
    w2, b2 = init_gc_params(k_g2, nhid, nclass)

    # adjacency preprocessing hoisted (static graph): pay it once, reuse.
    pre = precompute_adj(adj, block=256)
    out = gcn_forward(x, adj, w1, b1, w2, b2, pre=pre)
    out = jax.block_until_ready(out)

    ref = gcn_reference(x, adj, w1, b1, w2, b2)
    assert out.shape == (N, nclass)
    # bf16 features / weights / support on the MXU (f32 accumulate) + approx
    # reciprocal -> tolerance relaxed vs. the pure-f32 reference.
    assert jnp.allclose(out, ref, atol=1e-2), "mismatch vs JAX reference"
    assert jnp.allclose(out.sum(axis=1), 1.0, atol=5e-3), "softmax rows must sum to 1"

    print("KERNEL_OK")
</pallas_src>

<mosaic_0001>
module attributes {stable_mosaic.version = 11 : i64} {
  func.func @degree_kernel(%arg0: i32, %arg1: i32, %arg2: memref<256x256xbf16, #tpu.memory_space<vmem>>, %arg3: memref<256x1xf32, #tpu.memory_space<vmem>>) attributes {dimension_semantics = [#tpu.dimension_semantics<parallel>, #tpu.dimension_semantics<arbitrary>], iteration_bounds = array<i64: 2, 2>, scalar_prefetch = 0 : i64, scratch_operands = 0 : i64, tpu.core_type = #tpu.core_type<tc>, window_params = [{transform_indices = @transform_0, window_bounds = array<i64: 256, 256>}, {transform_indices = @transform_1, window_bounds = array<i64: 256, 1>}]} {
    %c0_i32 = arith.constant 0 : i32
    %0 = arith.cmpi eq, %arg1, %c0_i32 : i32
    %1 = arith.extui %0 : i1 to i32
    %c0_i32_0 = arith.constant 0 : i32
    %2 = arith.cmpi ne, %1, %c0_i32_0 : i32
    scf.if %2 {
      %cst_7 = arith.constant 1.000000e+00 : f32
      %13 = vector.broadcast %cst_7 : f32 to vector<256x1xf32>
      %c0_8 = arith.constant 0 : index
      %c0_9 = arith.constant 0 : index
      %14 = vector.load %arg3[%c0_8, %c0_9] : memref<256x1xf32, #tpu.memory_space<vmem>>, vector<256x1xf32>
      tpu.vector_store %arg3[%c0_8, %c0_9], %13 {strides = array<i32>} : memref<256x1xf32, #tpu.memory_space<vmem>>, vector<256x1xf32>,
    } else {
    }
    %c0 = arith.constant 0 : index
    %c0_1 = arith.constant 0 : index
    %3 = vector.load %arg3[%c0, %c0_1] : memref<256x1xf32, #tpu.memory_space<vmem>>, vector<256x1xf32>
    %c0_2 = arith.constant 0 : index
    %c0_3 = arith.constant 0 : index
    %4 = vector.load %arg2[%c0_2, %c0_3] : memref<256x256xbf16, #tpu.memory_space<vmem>>, vector<256x256xbf16>
    %5 = arith.extf %4 : vector<256x256xbf16> to vector<256x256xf32>
    %cst = arith.constant dense<0.000000e+00> : vector<256xf32>
    %6 = vector.multi_reduction <add>, %5, %cst [1] : vector<256x256xf32> to vector<256xf32>
    %7 = vector.shape_cast %6 : vector<256xf32> to vector<256x1xf32>
    %8 = arith.addf %3, %7 : vector<256x1xf32>
    %c0_4 = arith.constant 0 : index
    %c0_5 = arith.constant 0 : index
    %9 = vector.load %arg3[%c0_4, %c0_5] : memref<256x1xf32, #tpu.memory_space<vmem>>, vector<256x1xf32>
    tpu.vector_store %arg3[%c0_4, %c0_5], %8 {strides = array<i32>} : memref<256x1xf32, #tpu.memory_space<vmem>>, vector<256x1xf32>,
    %c1_i32 = arith.constant 1 : i32
    %10 = arith.cmpi eq, %arg1, %c1_i32 : i32
    %11 = arith.extui %10 : i1 to i32
    %c0_i32_6 = arith.constant 0 : i32
    %12 = arith.cmpi ne, %11, %c0_i32_6 : i32
    scf.if %12 {
      %c0_7 = arith.constant 0 : index
      %c0_8 = arith.constant 0 : index
      %13 = vector.load %arg3[%c0_7, %c0_8] : memref<256x1xf32, #tpu.memory_space<vmem>>, vector<256x1xf32>
      %14 = math.rsqrt %13 : vector<256x1xf32>
      %c0_9 = arith.constant 0 : index
      %c0_10 = arith.constant 0 : index
      %15 = vector.load %arg3[%c0_9, %c0_10] : memref<256x1xf32, #tpu.memory_space<vmem>>, vector<256x1xf32>
      tpu.vector_store %arg3[%c0_9, %c0_10], %14 {strides = array<i32>} : memref<256x1xf32, #tpu.memory_space<vmem>>, vector<256x1xf32>,
    } else {
    }
    return
  }
  func.func @transform_0(%arg0: i32, %arg1: i32) -> (i32, i32) {
    %c0_i32 = arith.constant 0 : i32
    return %arg0, %arg1 : i32, i32
  }
  func.func @transform_1(%arg0: i32, %arg1: i32) -> (i32, i32) {
    %c0_i32 = arith.constant 0 : i32
    %c0_i32_0 = arith.constant 0 : i32
    return %arg0, %c0_i32 : i32, i32
  }
}

</mosaic_0001>

<llo_original>
// kernel: tpu_custom_call.1
$region0: #{tpu_custom_call.1}
  #allocation0 [shape = 'u32[]', space=smem, size = 0x4, offset = 0x4, fixed_abs, tag = 'smem constant byte address 0x4 - core index']
  #allocation1 [shape = 'u32[72,128]{1,0:T(1,128)}', space=vmem, size = 0x9000, scoped, tag = 'internal scratch']
  %s0 = inlined_call_operand.hbm [shape: bf16[512,512], index: 0, kind: input, shape index: {}]
  %s1 = inlined_call_operand.vmem [shape: f32[512,1], index: 1, kind: output, shape index: {}]
  %s2 = sld [smem:[#allocation0]]
  $region49: #{tpu_custom_call.1} parent=0
    _
  %s4 = ssub.s32 1, %s2
  %s5 = scalar_select 0, %s4, %s2
  $region1: #{tpu_custom_call.1} parent=0
    #allocation2 [shape = 'u8[262144]{0}', space=vmem, size = 0x40000, scoped, tag = 'input window, operand 0']
    #allocation3 [shape = 's32[2]{0}', space=sflag, size = 0x8, scoped, tag = 'scoped memory for tpu_custom_call.1']
    %6 = vsyncpa [#allocation3], 0
    %s7 = scalar_lea.sflag [#allocation3], 1
    %8 = vsyncpa %s7, 0
    loop: start=0, step=1, limit=6
    $region2: #{tpu_custom_call.1} parent=1 // loop_pre_header
      _
    $region3: #{tpu_custom_call.1} parent=1 // loop_header
      %s10 = sphi 0, %s14
      %p11 = scmp.ge.s32.totalorder %s10, 6
      %s17 = sphi 0, %s29
      %s18 = sphi 0, %s25
      %s19 = sphi 0, %s17
      %s20 = sphi 0, %s18
      %s21 = sphi 0, %s19
      %s22 = sphi 0, %s20
      %s34 = sphi 0, %s36
      %s37 = sphi 0, %s34
      %s38 = sphi 0, %s37
      %s54 = sphi 0, %s38
      %s60 = sphi 0, %s62
      %s63 = sphi 0, %s60
      %s64 = sphi 0, %s63
      %s80 = sphi 0, %s64
    $region4: #{tpu_custom_call.1} parent=1 // loop_header_branch
      %13 = sbr.rel (%p11) target = $region8
    $region5: #{tpu_custom_call.1} parent=1 // loop_body
      %s15 = ssub.s32 %s10, 1
      %s16 = ssub.s32 %s10, 2
      %s23 = sadd.s32 1, %s18
      %p24 = scmp.ge.s32.totalorder %s23, 2
      %s25 = scalar_select %p24, 0, %s23
      %s26 = sadd.s32 1, %s17
      %s27 = scalar_select %p24, %s26, %s17
      %p28 = scmp.ge.s32.totalorder %s27, 2
      %s29 = scalar_select %p28, 0, %s27
      %s30 = ssub.s32 %s17, %s29
      %s31 = ssub.s32 %s18, %s25
      %s32 = sor.u32 %s30, %s31
      %p33 = scmp.eq.s32.totalorder %s32, 0
      %s35 = sadd.s32 %s34, 1
      %s36 = scalar_select %p33, %s34, %s35
      %p39 = pneg %p33
      %p40 = scmp.eq.s32.totalorder %s10, 3
      %p41 = por %p39, %p40
      %p42 = scmp.ne.s32.totalorder %s34, %s37
      %p43 = scmp.eq.s32.totalorder %s10, 0
      %p44 = por %p42, %p43
      %p45 = scmp.ne.s32.totalorder %s34, %s37
      %p46 = scmp.eq.s32.totalorder %s15, 3
      %p47 = por %p45, %p46
      %p48 = scmp.ne.s32.totalorder %s37, %s38
      %p49 = scmp.eq.s32.totalorder %s15, 0
      %p50 = por %p48, %p49
      %p51 = scmp.ne.s32.totalorder %s37, %s38
      %p52 = scmp.eq.s32.totalorder %s16, 3
      %p53 = por %p51, %p52
      %p55 = scmp.ne.s32.totalorder %s38, %s54
      %p56 = scmp.eq.s32.totalorder %s16, 0
      %p57 = por %p55, %p56
      %s58 = ssub.s32 %s17, %s29
      %p59 = scmp.eq.s32.totalorder %s58, 0
      %s61 = sadd.s32 %s60, 1
      %s62 = scalar_select %p59, %s60, %s61
      %p65 = pneg %p59
      %p66 = scmp.eq.s32.totalorder %s10, 3
      %p67 = por %p65, %p66
      %p68 = scmp.ne.s32.totalorder %s60, %s63
      %p69 = scmp.eq.s32.totalorder %s10, 0
      %p70 = por %p68, %p69
      %p71 = scmp.ne.s32.totalorder %s60, %s63
      %p72 = scmp.eq.s32.totalorder %s15, 3
      %p73 = por %p71, %p72
      %p74 = scmp.ne.s32.totalorder %s63, %s64
      %p75 = scmp.eq.s32.totalorder %s15, 0
      %p76 = por %p74, %p75
      %p77 = scmp.ne.s32.totalorder %s63, %s64
      %p78 = scmp.eq.s32.totalorder %s16, 3
      %p79 = por %p77, %p78
      %p81 = scmp.ne.s32.totalorder %s64, %s80
      %p82 = scmp.eq.s32.totalorder %s16, 0
      %p83 = por %p81, %p82
      %p84 = scmp.le.s32.totalorder 1, %s10
      %p85 = scmp.lt.s32.totalorder %s10, 5
      %p86 = pnand %p84, %p85
      %p87 = pneg %p86
      // Predicated region
      $region9: #{tpu_custom_call.1} parent=5 // pred_check
        _
      $region10: #{tpu_custom_call.1} parent=5 // pred_check_branch
        %89 = sbr.rel (%p86) target = $region12
      $region11: #{tpu_custom_call.1} parent=5 // pred_region
        %s90 = ssub.s32 %s10, 1
      $region12: #{tpu_custom_call.1} parent=5 // pred_fallthru
        _
      %p91 = scmp.lt.s32.totalorder %s10, 4
      // Predicated region
      $region13: #{tpu_custom_call.1} parent=5 // pred_check
        %p92 = pneg %p91
      $region14: #{tpu_custom_call.1} parent=5 // pred_check_branch
        %94 = sbr.rel (%p92) target = $region16
      $region15: #{tpu_custom_call.1} parent=5 // pred_region
        // Predicated region
        $region17: #{tpu_custom_call.1} parent=15 // pred_check
          %p95 = pneg %p44
        $region18: #{tpu_custom_call.1} parent=15 // pred_check_branch
          %97 = sbr.rel (%p95) target = $region20
        $region19: #{tpu_custom_call.1} parent=15 // pred_region
          %s98 = sand.u32 %s34, 1
          %s99 = scalar_lea.sflag [#allocation3], %s98
          %s100 = sand.u32 %s34, 1
          %s101 = smul.addr %s100, 256
          %s102 = scalar_lea.vmem [#allocation2], %s101
          %s103 = smul.u32 32, %s17
          %s104 = smul.u32 2, %s18
          %106 = vsyncadd %s99, 0
          %s107 = smul.addr %s103, 4
          %s108 = sadd.s32 %s104, %s107
          %s109 = smul.addr %s108, 4
          %s110 = scalar_lea.hbm %s0, %s109
          %s111 = sshll.u32 %s110, 4
          %s112 = int_to_ptr.hbm [resolvable:$true] %s111
          %s113 = sshll.u32 %s102, 4
          %s114 = int_to_ptr.vmem [resolvable:$true] %s113
          %119 = dma.hbm_to_vmem [thread:$0]  %s112, 4096, %s114, %s99, 256, 128, 8
        $region20: #{tpu_custom_call.1} parent=15 // pred_fallthru
          _
      $region16: #{tpu_custom_call.1} parent=5 // pred_fallthru
        _
      %p120 = scmp.le.s32.totalorder 1, %s10
      %p121 = scmp.lt.s32.totalorder %s10, 5
      %p122 = pnand %p120, %p121
      %p123 = pneg %p122
      // Predicated region
      $region21: #{tpu_custom_call.1} parent=5 // pred_check
        _
      $region22: #{tpu_custom_call.1} parent=5 // pred_check_branch
        %125 = sbr.rel (%p122) target = $region24
      $region23: #{tpu_custom_call.1} parent=5 // pred_region
        %s126 = ssub.s32 %s10, 1
        %s127 = sand.u32 %s37, 1
        %s128 = scalar_lea.sflag [#allocation3], %s127
        %s129 = sand.u32 %s37, 1
        %s130 = smul.addr %s129, 256
        %s131 = scalar_lea.vmem [#allocation2], %s130
        // Predicated region
        $region25: #{tpu_custom_call.1} parent=23 // pred_check
          %p132 = pneg %p50
        $region26: #{tpu_custom_call.1} parent=23 // pred_check_branch
          %134 = sbr.rel (%p132) target = $region28
        $region27: #{tpu_custom_call.1} parent=23 // pred_region
          %136 = dma.done %s128, 4096
        $region28: #{tpu_custom_call.1} parent=23 // pred_fallthru
          _
        %s137 = sand.u32 %s37, 1
        %s138 = scalar_lea.sflag [#allocation3], %s137
        %s139 = sand.u32 %s37, 1
        %s140 = smul.addr %s139, 256
        %s141 = scalar_lea.vmem [#allocation2], %s140
        %p142 = pneg %p50
        %p143 = pneg %p47
        %p144 = pneg %p76
        %p145 = pneg %p73
        %s146 = smul.u32 32, %s19
        %p147 = scmp.lt.s32.totalorder %s146, 63
        %s148 = scalar_select %p147, %s146, 63
        %s149 = smul.addr %s148, 8
        %s150 = scalar_lea.vmem %s1, %s149
        %s151 = smul.u32 32, %s19
        %s152 = smul.u32 2, %s20
        %s153 = smul.u32 32, %s19
        %p154 = scmp.lt.s32.totalorder %s153, 63
        %s155 = scalar_select %p154, %s153, 63
        %s156 = smul.addr %s155, 8
        %s157 = scalar_lea.vmem %s1, %s156
        %s158 = smul.u32 32, %s19
        %p159 = scmp.eq.s32.totalorder %s20, 0
        // Predicated region
        $region29: #{tpu_custom_call.1} parent=23 // pred_check
          %p160 = pneg %p159
        $region30: #{tpu_custom_call.1} parent=23 // pred_check_branch
          %162 = sbr.rel (%p160) target = $region32
        $region31: #{tpu_custom_call.1} parent=23 // pred_region
          %vm163 = vcmask 7168
          %164 = vst.msk [vmem:[%s157] sm:$0xff] %vm163, 1.0
          %165 = vst.msk [vmem:[%s157 + $0x8] sm:$0xff] %vm163, 1.0
          %166 = vst.msk [vmem:[%s157 + $0x10] sm:$0xff] %vm163, 1.0
          %167 = vst.msk [vmem:[%s157 + $0x18] sm:$0xff] %vm163, 1.0
          %168 = vst.msk [vmem:[%s157 + $0x20] sm:$0xff] %vm163, 1.0
          %169 = vst.msk [vmem:[%s157 + $0x28] sm:$0xff] %vm163, 1.0
          %170 = vst.msk [vmem:[%s157 + $0x30] sm:$0xff] %vm163, 1.0
          %171 = vst.msk [vmem:[%s157 + $0x38] sm:$0xff] %vm163, 1.0
          %172 = vst.msk [vmem:[%s157 + $0x40] sm:$0xff] %vm163, 1.0
          %173 = vst.msk [vmem:[%s157 + $0x48] sm:$0xff] %vm163, 1.0
          %174 = vst.msk [vmem:[%s157 + $0x50] sm:$0xff] %vm163, 1.0
          %175 = vst.msk [vmem:[%s157 + $0x58] sm:$0xff] %vm163, 1.0
          %176 = vst.msk [vmem:[%s157 + $0x60] sm:$0xff] %vm163, 1.0
          %177 = vst.msk [vmem:[%s157 + $0x68] sm:$0xff] %vm163, 1.0
          %178 = vst.msk [vmem:[%s157 + $0x70] sm:$0xff] %vm163, 1.0
          %179 = vst.msk [vmem:[%s157 + $0x78] sm:$0xff] %vm163, 1.0
          %180 = vst.msk [vmem:[%s157 + $0x80] sm:$0xff] %vm163, 1.0
          %181 = vst.msk [vmem:[%s157 + $0x88] sm:$0xff] %vm163, 1.0
          %182 = vst.msk [vmem:[%s157 + $0x90] sm:$0xff] %vm163, 1.0
          %183 = vst.msk [vmem:[%s157 + $0x98] sm:$0xff] %vm163, 1.0
          %184 = vst.msk [vmem:[%s157 + $0xa0] sm:$0xff] %vm163, 1.0
          %185 = vst.msk [vmem:[%s157 + $0xa8] sm:$0xff] %vm163, 1.0
          %186 = vst.msk [vmem:[%s157 + $0xb0] sm:$0xff] %vm163, 1.0
          %187 = vst.msk [vmem:[%s157 + $0xb8] sm:$0xff] %vm163, 1.0
          %188 = vst.msk [vmem:[%s157 + $0xc0] sm:$0xff] %vm163, 1.0
          %189 = vst.msk [vmem:[%s157 + $0xc8] sm:$0xff] %vm163, 1.0
          %190 = vst.msk [vmem:[%s157 + $0xd0] sm:$0xff] %vm163, 1.0
          %191 = vst.msk [vmem:[%s157 + $0xd8] sm:$0xff] %vm163, 1.0
          %192 = vst.msk [vmem:[%s157 + $0xe0] sm:$0xff] %vm163, 1.0
          %193 = vst.msk [vmem:[%s157 + $0xe8] sm:$0xff] %vm163, 1.0
          %194 = vst.msk [vmem:[%s157 + $0xf0] sm:$0xff] %vm163, 1.0
          %195 = vst.msk [vmem:[%s157 + $0xf8] sm:$0xff] %vm163, 1.0
        $region32: #{tpu_custom_call.1} parent=23 // pred_fallthru
          _
        %v196 = vld [vmem:[%s157] sm:$0xff]
        %v197 = vld [vmem:[%s157 + $0x8] sm:$0xff]
        %v198 = vld [vmem:[%s157 + $0x10] sm:$0xff]
        %v199 = vld [vmem:[%s157 + $0x18] sm:$0xff]
        %v200 = vld [vmem:[%s157 + $0x20] sm:$0xff]
        %v201 = vld [vmem:[%s157 + $0x28] sm:$0xff]
        %v202 = vld [vmem:[%s157 + $0x30] sm:$0xff]
        %v203 = vld [vmem:[%s157 + $0x38] sm:$0xff]
        %v204 = vld [vmem:[%s157 + $0x40] sm:$0xff]
        %v205 = vld [vmem:[%s157 + $0x48] sm:$0xff]
        %v206 = vld [vmem:[%s157 + $0x50] sm:$0xff]
        %v207 = vld [vmem:[%s157 + $0x58] sm:$0xff]
        %v208 = vld [vmem:[%s157 + $0x60] sm:$0xff]
        %v209 = vld [vmem:[%s157 + $0x68] sm:$0xff]
        %v210 = vld [vmem:[%s157 + $0x70] sm:$0xff]
        %v211 = vld [vmem:[%s157 + $0x78] sm:$0xff]
        %v212 = vld [vmem:[%s157 + $0x80] sm:$0xff]
        %v213 = vld [vmem:[%s157 + $0x88] sm:$0xff]
        %v214 = vld [vmem:[%s157 + $0x90] sm:$0xff]
        %v215 = vld [vmem:[%s157 + $0x98] sm:$0xff]
        %v216 = vld [vmem:[%s157 + $0xa0] sm:$0xff]
        %v217 = vld [vmem:[%s157 + $0xa8] sm:$0xff]
        %v218 = vld [vmem:[%s157 + $0xb0] sm:$0xff]
        %v219 = vld [vmem:[%s157 + $0xb8] sm:$0xff]
        %v220 = vld [vmem:[%s157 + $0xc0] sm:$0xff]
        %v221 = vld [vmem:[%s157 + $0xc8] sm:$0xff]
        %v222 = vld [vmem:[%s157 + $0xd0] sm:$0xff]
        %v223 = vld [vmem:[%s157 + $0xd8] sm:$0xff]
        %v224 = vld [vmem:[%s157 + $0xe0] sm:$0xff]
        %v225 = vld [vmem:[%s157 + $0xe8] sm:$0xff]
        %v226 = vld [vmem:[%s157 + $0xf0] sm:$0xff]
        %v227 = vld [vmem:[%s157 + $0xf8] sm:$0xff]
        %v228 = vld [vmem:[%s131] sm:$0xff]
        %v229 = vld [vmem:[%s131 + $0x8] sm:$0xff]
        %v230 = vld [vmem:[%s131 + $0x10] sm:$0xff]
        %v231 = vld [vmem:[%s131 + $0x18] sm:$0xff]
        %v232 = vld [vmem:[%s131 + $0x20] sm:$0xff]
        %v233 = vld [vmem:[%s131 + $0x28] sm:$0xff]
        %v234 = vld [vmem:[%s131 + $0x30] sm:$0xff]
        %v235 = vld [vmem:[%s131 + $0x38] sm:$0xff]
        %v236 = vld [vmem:[%s131 + $0x40] sm:$0xff]
        %v237 = vld [vmem:[%s131 + $0x48] sm:$0xff]
        %v238 = vld [vmem:[%s131 + $0x50] sm:$0xff]
        %v239 = vld [vmem:[%s131 + $0x58] sm:$0xff]
        %v240 = vld [vmem:[%s131 + $0x60] sm:$0xff]
        %v241 = vld [vmem:[%s131 + $0x68] sm:$0xff]
        %v242 = vld [vmem:[%s131 + $0x70] sm:$0xff]
        %v243 = vld [vmem:[%s131 + $0x78] sm:$0xff]
        %v244 = vld [vmem:[%s131 + $0x80] sm:$0xff]
        %v245 = vld [vmem:[%s131 + $0x88] sm:$0xff]
        %v246 = vld [vmem:[%s131 + $0x90] sm:$0xff]
        %v247 = vld [vmem:[%s131 + $0x98] sm:$0xff]
        %v248 = vld [vmem:[%s131 + $0xa0] sm:$0xff]
        %v249 = vld [vmem:[%s131 + $0xa8] sm:$0xff]
        %v250 = vld [vmem:[%s131 + $0xb0] sm:$0xff]
        %v251 = vld [vmem:[%s131 + $0xb8] sm:$0xff]
        %v252 = vld [vmem:[%s131 + $0xc0] sm:$0xff]
        %v253 = vld [vmem:[%s131 + $0xc8] sm:$0xff]
        %v254 = vld [vmem:[%s131 + $0xd0] sm:$0xff]
        %v255 = vld [vmem:[%s131 + $0xd8] sm:$0xff]
        %v256 = vld [vmem:[%s131 + $0xe0] sm:$0xff]
        %v257 = vld [vmem:[%s131 + $0xe8] sm:$0xff]
        %v258 = vld [vmem:[%s131 + $0xf0] sm:$0xff]
        %v259 = vld [vmem:[%s131 + $0xf8] sm:$0xff]
        %v260 = vunpack.c.l.bf16 %v228
        %v261 = vunpack.c.h.bf16 %v228
        %v262 = vunpack.c.l.bf16 %v229
        %v263 = vunpack.c.h.bf16 %v229
        %v264 = vunpack.c.l.bf16 %v230
        %v265 = vunpack.c.h.bf16 %v230
        %v266 = vunpack.c.l.bf16 %v231
        %v267 = vunpack.c.h.bf16 %v231
        %v268 = vunpack.c.l.bf16 %v232
        %v269 = vunpack.c.h.bf16 %v232
        %v270 = vunpack.c.l.bf16 %v233
        %v271 = vunpack.c.h.bf16 %v233
        %v272 = vunpack.c.l.bf16 %v234
        %v273 = vunpack.c.h.bf16 %v234
        %v274 = vunpack.c.l.bf16 %v235
        %v275 = vunpack.c.h.bf16 %v235
        %v276 = vunpack.c.l.bf16 %v236
        %v277 = vunpack.c.h.bf16 %v236
        %v278 = vunpack.c.l.bf16 %v237
        %v279 = vunpack.c.h.bf16 %v237
        %v280 = vunpack.c.l.bf16 %v238
        %v281 = vunpack.c.h.bf16 %v238
        %v282 = vunpack.c.l.bf16 %v239
        %v283 = vunpack.c.h.bf16 %v239
        %v284 = vunpack.c.l.bf16 %v240
        %v285 = vunpack.c.h.bf16 %v240
        %v286 = vunpack.c.l.bf16 %v241
        %v287 = vunpack.c.h.bf16 %v241
        %v288 = vunpack.c.l.bf16 %v242
        %v289 = vunpack.c.h.bf16 %v242
        %v290 = vunpack.c.l.bf16 %v243
        %v291 = vunpack.c.h.bf16 %v243
        %v292 = vunpack.c.l.bf16 %v244
        %v293 = vunpack.c.h.bf16 %v244
        %v294 = vunpack.c.l.bf16 %v245
        %v295 = vunpack.c.h.bf16 %v245
        %v296 = vunpack.c.l.bf16 %v246
        %v297 = vunpack.c.h.bf16 %v246
        %v298 = vunpack.c.l.bf16 %v247
        %v299 = vunpack.c.h.bf16 %v247
        %v300 = vunpack.c.l.bf16 %v248
        %v301 = vunpack.c.h.bf16 %v248
        %v302 = vunpack.c.l.bf16 %v249
        %v303 = vunpack.c.h.bf16 %v249
        %v304 = vunpack.c.l.bf16 %v250
        %v305 = vunpack.c.h.bf16 %v250
        %v306 = vunpack.c.l.bf16 %v251
        %v307 = vunpack.c.h.bf16 %v251
        %v308 = vunpack.c.l.bf16 %v252
        %v309 = vunpack.c.h.bf16 %v252
        %v310 = vunpack.c.l.bf16 %v253
        %v311 = vunpack.c.h.bf16 %v253
        %v312 = vunpack.c.l.bf16 %v254
        %v313 = vunpack.c.h.bf16 %v254
        %v314 = vunpack.c.l.bf16 %v255
        %v315 = vunpack.c.h.bf16 %v255
        %v316 = vunpack.c.l.bf16 %v256
        %v317 = vunpack.c.h.bf16 %v256
        %v318 = vunpack.c.l.bf16 %v257
        %v319 = vunpack.c.h.bf16 %v257
        %v320 = vunpack.c.l.bf16 %v258
        %v321 = vunpack.c.h.bf16 %v258
        %v322 = vunpack.c.l.bf16 %v259
        %v323 = vunpack.c.h.bf16 %v259
        %v324 = vadd.f32 %v260, %v261
        %325 = vadd.xlane.f32.xlu0 %v324
        %v326 = vpop.xlane.xlu0 %325
        %v327 = vadd.f32 %v262, %v263
        %328 = vadd.xlane.f32.xlu0 %v327
        %v329 = vpop.xlane.xlu0 %328
        %v330 = vadd.f32 %v264, %v265
        %331 = vadd.xlane.f32.xlu0 %v330
        %v332 = vpop.xlane.xlu0 %331
        %v333 = vadd.f32 %v266, %v267
        %334 = vadd.xlane.f32.xlu0 %v333
        %v335 = vpop.xlane.xlu0 %334
        %v336 = vadd.f32 %v268, %v269
        %337 = vadd.xlane.f32.xlu0 %v336
        %v338 = vpop.xlane.xlu0 %337
        %v339 = vadd.f32 %v270, %v271
        %340 = vadd.xlane.f32.xlu0 %v339
        %v341 = vpop.xlane.xlu0 %340
        %v342 = vadd.f32 %v272, %v273
        %343 = vadd.xlane.f32.xlu0 %v342
        %v344 = vpop.xlane.xlu0 %343
        %v345 = vadd.f32 %v274, %v275
        %346 = vadd.xlane.f32.xlu0 %v345
        %v347 = vpop.xlane.xlu0 %346
        %v348 = vadd.f32 %v276, %v277
        %349 = vadd.xlane.f32.xlu0 %v348
        %v350 = vpop.xlane.xlu0 %349
        %v351 = vadd.f32 %v278, %v279
        %352 = vadd.xlane.f32.xlu0 %v351
        %v353 = vpop.xlane.xlu0 %352
        %v354 = vadd.f32 %v280, %v281
        %355 = vadd.xlane.f32.xlu0 %v354
        %v356 = vpop.xlane.xlu0 %355
        %v357 = vadd.f32 %v282, %v283
        %358 = vadd.xlane.f32.xlu0 %v357
        %v359 = vpop.xlane.xlu0 %358
        %v360 = vadd.f32 %v284, %v285
        %361 = vadd.xlane.f32.xlu0 %v360
        %v362 = vpop.xlane.xlu0 %361
        %v363 = vadd.f32 %v286, %v287
        %364 = vadd.xlane.f32.xlu0 %v363
        %v365 = vpop.xlane.xlu0 %364
        %v366 = vadd.f32 %v288, %v289
        %367 = vadd.xlane.f32.xlu0 %v366
        %v368 = vpop.xlane.xlu0 %367
        %v369 = vadd.f32 %v290, %v291
        %370 = vadd.xlane.f32.xlu0 %v369
        %v371 = vpop.xlane.xlu0 %370
        %v372 = vadd.f32 %v292, %v293
        %373 = vadd.xlane.f32.xlu0 %v372
        %v374 = vpop.xlane.xlu0 %373
        %v375 = vadd.f32 %v294, %v295
        %376 = vadd.xlane.f32.xlu0 %v375
        %v377 = vpop.xlane.xlu0 %376
        %v378 = vadd.f32 %v296, %v297
        %379 = vadd.xlane.f32.xlu0 %v378
        %v380 = vpop.xlane.xlu0 %379
        %v381 = vadd.f32 %v298, %v299
        %382 = vadd.xlane.f32.xlu0 %v381
        %v383 = vpop.xlane.xlu0 %382
        %v384 = vadd.f32 %v300, %v301
        %385 = vadd.xlane.f32.xlu0 %v384
        %v386 = vpop.xlane.xlu0 %385
        %v387 = vadd.f32 %v302, %v303
        %388 = vadd.xlane.f32.xlu0 %v387
        %v389 = vpop.xlane.xlu0 %388
        %v390 = vadd.f32 %v304, %v305
        %391 = vadd.xlane.f32.xlu0 %v390
        %v392 = vpop.xlane.xlu0 %391
        %v393 = vadd.f32 %v306, %v307
        %394 = vadd.xlane.f32.xlu0 %v393
        %v395 = vpop.xlane.xlu0 %394
        %v396 = vadd.f32 %v308, %v309
        %397 = vadd.xlane.f32.xlu0 %v396
        %v398 = vpop.xlane.xlu0 %397
        %v399 = vadd.f32 %v310, %v311
        %400 = vadd.xlane.f32.xlu0 %v399
        %v401 = vpop.xlane.xlu0 %400
        %v402 = vadd.f32 %v312, %v313
        %403 = vadd.xlane.f32.xlu0 %v402
        %v404 = vpop.xlane.xlu0 %403
        %v405 = vadd.f32 %v314, %v315
        %406 = vadd.xlane.f32.xlu0 %v405
        %v407 = vpop.xlane.xlu0 %406
        %v408 = vadd.f32 %v316, %v317
        %409 = vadd.xlane.f32.xlu0 %v408
        %v410 = vpop.xlane.xlu0 %409
        %v411 = vadd.f32 %v318, %v319
        %412 = vadd.xlane.f32.xlu0 %v411
        %v413 = vpop.xlane.xlu0 %412
        %v414 = vadd.f32 %v320, %v321
        %415 = vadd.xlane.f32.xlu0 %v414
        %v416 = vpop.xlane.xlu0 %415
        %v417 = vadd.f32 %v322, %v323
        %418 = vadd.xlane.f32.xlu0 %v417
        %v419 = vpop.xlane.xlu0 %418
        %v420 = vadd.f32 %v196, %v326
        %v421 = vadd.f32 %v197, %v329
        %v422 = vadd.f32 %v198, %v332
        %v423 = vadd.f32 %v199, %v335
        %v424 = vadd.f32 %v200, %v338
        %v425 = vadd.f32 %v201, %v341
        %v426 = vadd.f32 %v202, %v344
        %v427 = vadd.f32 %v203, %v347
        %v428 = vadd.f32 %v204, %v350
        %v429 = vadd.f32 %v205, %v353
        %v430 = vadd.f32 %v206, %v356
        %v431 = vadd.f32 %v207, %v359
        %v432 = vadd.f32 %v208, %v362
        %v433 = vadd.f32 %v209, %v365
        %v434 = vadd.f32 %v210, %v368
        %v435 = vadd.f32 %v211, %v371
        %v436 = vadd.f32 %v212, %v374
        %v437 = vadd.f32 %v213, %v377
        %v438 = vadd.f32 %v214, %v380
        %v439 = vadd.f32 %v215, %v383
        %v440 = vadd.f32 %v216, %v386
        %v441 = vadd.f32 %v217, %v389
        %v442 = vadd.f32 %v218, %v392
        %v443 = vadd.f32 %v219, %v395
        %v444 = vadd.f32 %v220, %v398
        %v445 = vadd.f32 %v221, %v401
        %v446 = vadd.f32 %v222, %v404
        %v447 = vadd.f32 %v223, %v407
        %v448 = vadd.f32 %v224, %v410
        %v449 = vadd.f32 %v225, %v413
        %v450 = vadd.f32 %v226, %v416
        %v451 = vadd.f32 %v227, %v419
        %vm452 = vcmask 7168
        %453 = vst.msk [vmem:[%s157] sm:$0xff] %vm452, %v420
        %454 = vst.msk [vmem:[%s157 + $0x8] sm:$0xff] %vm452, %v421
        %455 = vst.msk [vmem:[%s157 + $0x10] sm:$0xff] %vm452, %v422
        %456 = vst.msk [vmem:[%s157 + $0x18] sm:$0xff] %vm452, %v423
        %457 = vst.msk [vmem:[%s157 + $0x20] sm:$0xff] %vm452, %v424
        %458 = vst.msk [vmem:[%s157 + $0x28] sm:$0xff] %vm452, %v425
        %459 = vst.msk [vmem:[%s157 + $0x30] sm:$0xff] %vm452, %v426
        %460 = vst.msk [vmem:[%s157 + $0x38] sm:$0xff] %vm452, %v427
        %461 = vst.msk [vmem:[%s157 + $0x40] sm:$0xff] %vm452, %v428
        %462 = vst.msk [vmem:[%s157 + $0x48] sm:$0xff] %vm452, %v429
        %463 = vst.msk [vmem:[%s157 + $0x50] sm:$0xff] %vm452, %v430
        %464 = vst.msk [vmem:[%s157 + $0x58] sm:$0xff] %vm452, %v431
        %465 = vst.msk [vmem:[%s157 + $0x60] sm:$0xff] %vm452, %v432
        %466 = vst.msk [vmem:[%s157 + $0x68] sm:$0xff] %vm452, %v433
        %467 = vst.msk [vmem:[%s157 + $0x70] sm:$0xff] %vm452, %v434
        %468 = vst.msk [vmem:[%s157 + $0x78] sm:$0xff] %vm452, %v435
        %469 = vst.msk [vmem:[%s157 + $0x80] sm:$0xff] %vm452, %v436
        %470 = vst.msk [vmem:[%s157 + $0x88] sm:$0xff] %vm452, %v437
        %471 = vst.msk [vmem:[%s157 + $0x90] sm:$0xff] %vm452, %v438
        %472 = vst.msk [vmem:[%s157 + $0x98] sm:$0xff] %vm452, %v439
        %473 = vst.msk [vmem:[%s157 + $0xa0] sm:$0xff] %vm452, %v440
        %474 = vst.msk [vmem:[%s157 + $0xa8] sm:$0xff] %vm452, %v441
        %475 = vst.msk [vmem:[%s157 + $0xb0] sm:$0xff] %vm452, %v442
        %476 = vst.msk [vmem:[%s157 + $0xb8] sm:$0xff] %vm452, %v443
        %477 = vst.msk [vmem:[%s157 + $0xc0] sm:$0xff] %vm452, %v444
        %478 = vst.msk [vmem:[%s157 + $0xc8] sm:$0xff] %vm452, %v445
        %479 = vst.msk [vmem:[%s157 + $0xd0] sm:$0xff] %vm452, %v446
        %480 = vst.msk [vmem:[%s157 + $0xd8] sm:$0xff] %vm452, %v447
        %481 = vst.msk [vmem:[%s157 + $0xe0] sm:$0xff] %vm452, %v448
        %482 = vst.msk [vmem:[%s157 + $0xe8] sm:$0xff] %vm452, %v449
        %483 = vst.msk [vmem:[%s157 + $0xf0] sm:$0xff] %vm452, %v450
        %484 = vst.msk [vmem:[%s157 + $0xf8] sm:$0xff] %vm452, %v451
        %p485 = scmp.eq.s32.totalorder %s20, 1
        // Predicated region
        $region33: #{tpu_custom_call.1} parent=23 // pred_check
          %p486 = pneg %p485
        $region34: #{tpu_custom_call.1} parent=23 // pred_check_branch
          %488 = sbr.rel (%p486) target = $region36
        $region35: #{tpu_custom_call.1} parent=23 // pred_region
          %v489 = vld [vmem:[%s157] sm:$0xff]
          %v490 = vld [vmem:[%s157 + $0x8] sm:$0xff]
          %v491 = vld [vmem:[%s157 + $0x10] sm:$0xff]
          %v492 = vld [vmem:[%s157 + $0x18] sm:$0xff]
          %v493 = vld [vmem:[%s157 + $0x20] sm:$0xff]
          %v494 = vld [vmem:[%s157 + $0x28] sm:$0xff]
          %v495 = vld [vmem:[%s157 + $0x30] sm:$0xff]
          %v496 = vld [vmem:[%s157 + $0x38] sm:$0xff]
          %v497 = vld [vmem:[%s157 + $0x40] sm:$0xff]
          %v498 = vld [vmem:[%s157 + $0x48] sm:$0xff]
          %v499 = vld [vmem:[%s157 + $0x50] sm:$0xff]
          %v500 = vld [vmem:[%s157 + $0x58] sm:$0xff]
          %v501 = vld [vmem:[%s157 + $0x60] sm:$0xff]
          %v502 = vld [vmem:[%s157 + $0x68] sm:$0xff]
          %v503 = vld [vmem:[%s157 + $0x70] sm:$0xff]
          %v504 = vld [vmem:[%s157 + $0x78] sm:$0xff]
          %v505 = vld [vmem:[%s157 + $0x80] sm:$0xff]
          %v506 = vld [vmem:[%s157 + $0x88] sm:$0xff]
          %v507 = vld [vmem:[%s157 + $0x90] sm:$0xff]
          %v508 = vld [vmem:[%s157 + $0x98] sm:$0xff]
          %v509 = vld [vmem:[%s157 + $0xa0] sm:$0xff]
          %v510 = vld [vmem:[%s157 + $0xa8] sm:$0xff]
          %v511 = vld [vmem:[%s157 + $0xb0] sm:$0xff]
          %v512 = vld [vmem:[%s157 + $0xb8] sm:$0xff]
          %v513 = vld [vmem:[%s157 + $0xc0] sm:$0xff]
          %v514 = vld [vmem:[%s157 + $0xc8] sm:$0xff]
          %v515 = vld [vmem:[%s157 + $0xd0] sm:$0xff]
          %v516 = vld [vmem:[%s157 + $0xd8] sm:$0xff]
          %v517 = vld [vmem:[%s157 + $0xe0] sm:$0xff]
          %v518 = vld [vmem:[%s157 + $0xe8] sm:$0xff]
          %v519 = vld [vmem:[%s157 + $0xf0] sm:$0xff]
          %v520 = vld [vmem:[%s157 + $0xf8] sm:$0xff]
          %v521 = vrsqrt.pop %v489
          %v522 = vmul.f32 %v521, %v489
          %v523 = vmul.f32 %v522, %v521
          %v524 = vmul.f32 0.5, %v523
          %v525 = vsub.f32 1.5, %v524
          %v526 = vmul.f32 %v521, %v525
          %vm527 = vweird.f32 %v489
          %vm528 = vweird.f32 %v521
          %vm529 = vmor %vm527, %vm528
          %v530 = vsel %vm529, %v521, %v526
          %v531 = vrsqrt.pop %v490
          %v532 = vmul.f32 %v531, %v490
          %v533 = vmul.f32 %v532, %v531
          %v534 = vmul.f32 0.5, %v533
          %v535 = vsub.f32 1.5, %v534
          %v536 = vmul.f32 %v531, %v535
          %vm537 = vweird.f32 %v490
          %vm538 = vweird.f32 %v531
          %vm539 = vmor %vm537, %vm538
          %v540 = vsel %vm539, %v531, %v536
          %v541 = vrsqrt.pop %v491
          %v542 = vmul.f32 %v541, %v491
          %v543 = vmul.f32 %v542, %v541
          %v544 = vmul.f32 0.5, %v543
          %v545 = vsub.f32 1.5, %v544
          %v546 = vmul.f32 %v541, %v545
          %vm547 = vweird.f32 %v491
          %vm548 = vweird.f32 %v541
          %vm549 = vmor %vm547, %vm548
          %v550 = vsel %vm549, %v541, %v546
          %v551 = vrsqrt.pop %v492
          %v552 = vmul.f32 %v551, %v492
          %v553 = vmul.f32 %v552, %v551
          %v554 = vmul.f32 0.5, %v553
          %v555 = vsub.f32 1.5, %v554
          %v556 = vmul.f32 %v551, %v555
          %vm557 = vweird.f32 %v492
          %vm558 = vweird.f32 %v551
          %vm559 = vmor %vm557, %vm558
          %v560 = vsel %vm559, %v551, %v556
          %v561 = vrsqrt.pop %v493
          %v562 = vmul.f32 %v561, %v493
          %v563 = vmul.f32 %v562, %v561
          %v564 = vmul.f32 0.5, %v563
          %v565 = vsub.f32 1.5, %v564
          %v566 = vmul.f32 %v561, %v565
          %vm567 = vweird.f32 %v493
          %vm568 = vweird.f32 %v561
          %vm569 = vmor %vm567, %vm568
          %v570 = vsel %vm569, %v561, %v566
          %v571 = vrsqrt.pop %v494
          %v572 = vmul.f32 %v571, %v494
          %v573 = vmul.f32 %v572, %v571
          %v574 = vmul.f32 0.5, %v573
          %v575 = vsub.f32 1.5, %v574
          %v576 = vmul.f32 %v571, %v575
          %vm577 = vweird.f32 %v494
          %vm578 = vweird.f32 %v571
          %vm579 = vmor %vm577, %vm578
          %v580 = vsel %vm579, %v571, %v576
          %v581 = vrsqrt.pop %v495
          %v582 = vmul.f32 %v581, %v495
          %v583 = vmul.f32 %v582, %v581
          %v584 = vmul.f32 0.5, %v583
          %v585 = vsub.f32 1.5, %v584
          %v586 = vmul.f32 %v581, %v585
          %vm587 = vweird.f32 %v495
          %vm588 = vweird.f32 %v581
          %vm589 = vmor %vm587, %vm588
          %v590 = vsel %vm589, %v581, %v586
          %v591 = vrsqrt.pop %v496
          %v592 = vmul.f32 %v591, %v496
          %v593 = vmul.f32 %v592, %v591
          %v594 = vmul.f32 0.5, %v593
          %v595 = vsub.f32 1.5, %v594
          %v596 = vmul.f32 %v591, %v595
          %vm597 = vweird.f32 %v496
          %vm598 = vweird.f32 %v591
          %vm599 = vmor %vm597, %vm598
          %v600 = vsel %vm599, %v591, %v596
          %v601 = vrsqrt.pop %v497
          %v602 = vmul.f32 %v601, %v497
          %v603 = vmul.f32 %v602, %v601
          %v604 = vmul.f32 0.5, %v603
          %v605 = vsub.f32 1.5, %v604
          %v606 = vmul.f32 %v601, %v605
          %vm607 = vweird.f32 %v497
          %vm608 = vweird.f32 %v601
          %vm609 = vmor %vm607, %vm608
          %v610 = vsel %vm609, %v601, %v606
          %v611 = vrsqrt.pop %v498
          %v612 = vmul.f32 %v611, %v498
          %v613 = vmul.f32 %v612, %v611
          %v614 = vmul.f32 0.5, %v613
          %v615 = vsub.f32 1.5, %v614
          %v616 = vmul.f32 %v611, %v615
          %vm617 = vweird.f32 %v498
          %vm618 = vweird.f32 %v611
          %vm619 = vmor %vm617, %vm618
          %v620 = vsel %vm619, %v611, %v616
          %v621 = vrsqrt.pop %v499
          %v622 = vmul.f32 %v621, %v499
          %v623 = vmul.f32 %v622, %v621
          %v624 = vmul.f32 0.5, %v623
          %v625 = vsub.f32 1.5, %v624
          %v626 = vmul.f32 %v621, %v625
          %vm627 = vweird.f32 %v499
          %vm628 = vweird.f32 %v621
          %vm629 = vmor %vm627, %vm628
          %v630 = vsel %vm629, %v621, %v626
          %v631 = vrsqrt.pop %v500
          %v632 = vmul.f32 %v631, %v500
          %v633 = vmul.f32 %v632, %v631
          %v634 = vmul.f32 0.5, %v633
          %v635 = vsub.f32 1.5, %v634
          %v636 = vmul.f32 %v631, %v635
          %vm637 = vweird.f32 %v500
          %vm638 = vweird.f32 %v631
          %vm639 = vmor %vm637, %vm638
          %v640 = vsel %vm639, %v631, %v636
          %v641 = vrsqrt.pop %v501
          %v642 = vmul.f32 %v641, %v501
          %v643 = vmul.f32 %v642, %v641
          %v644 = vmul.f32 0.5, %v643
          %v645 = vsub.f32 1.5, %v644
          %v646 = vmul.f32 %v641, %v645
          %vm647 = vweird.f32 %v501
          %vm648 = vweird.f32 %v641
          %vm649 = vmor %vm647, %vm648
          %v650 = vsel %vm649, %v641, %v646
          %v651 = vrsqrt.pop %v502
          %v652 = vmul.f32 %v651, %v502
          %v653 = vmul.f32 %v652, %v651
          %v654 = vmul.f32 0.5, %v653
          %v655 = vsub.f32 1.5, %v654
          %v656 = vmul.f32 %v651, %v655
          %vm657 = vweird.f32 %v502
          %vm658 = vweird.f32 %v651
          %vm659 = vmor %vm657, %vm658
          %v660 = vsel %vm659, %v651, %v656
          %v661 = vrsqrt.pop %v503
          %v662 = vmul.f32 %v661, %v503
          %v663 = vmul.f32 %v662, %v661
          %v664 = vmul.f32 0.5, %v663
          %v665 = vsub.f32 1.5, %v664
          %v666 = vmul.f32 %v661, %v665
          %vm667 = vweird.f32 %v503
          %vm668 = vweird.f32 %v661
          %vm669 = vmor %vm667, %vm668
          %v670 = vsel %vm669, %v661, %v666
          %v671 = vrsqrt.pop %v504
          %v672 = vmul.f32 %v671, %v504
          %v673 = vmul.f32 %v672, %v671
          %v674 = vmul.f32 0.5, %v673
          %v675 = vsub.f32 1.5, %v674
          %v676 = vmul.f32 %v671, %v675
          %vm677 = vweird.f32 %v504
          %vm678 = vweird.f32 %v671
          %vm679 = vmor %vm677, %vm678
          %v680 = vsel %vm679, %v671, %v676
          %v681 = vrsqrt.pop %v505
          %v682 = vmul.f32 %v681, %v505
          %v683 = vmul.f32 %v682, %v681
          %v684 = vmul.f32 0.5, %v683
          %v685 = vsub.f32 1.5, %v684
          %v686 = vmul.f32 %v681, %v685
          %vm687 = vweird.f32 %v505
          %vm688 = vweird.f32 %v681
          %vm689 = vmor %vm687, %vm688
          %v690 = vsel %vm689, %v681, %v686
          %v691 = vrsqrt.pop %v506
          %v692 = vmul.f32 %v691, %v506
          %v693 = vmul.f32 %v692, %v691
          %v694 = vmul.f32 0.5, %v693
          %v695 = vsub.f32 1.5, %v694
          %v696 = vmul.f32 %v691, %v695
          %vm697 = vweird.f32 %v506
          %vm698 = vweird.f32 %v691
          %vm699 = vmor %vm697, %vm698
          %v700 = vsel %vm699, %v691, %v696
          %v701 = vrsqrt.pop %v507
          %v702 = vmul.f32 %v701, %v507
          %v703 = vmul.f32 %v702, %v701
          %v704 = vmul.f32 0.5, %v703
          %v705 = vsub.f32 1.5, %v704
          %v706 = vmul.f32 %v701, %v705
          %vm707 = vweird.f32 %v507
          %vm708 = vweird.f32 %v701
          %vm709 = vmor %vm707, %vm708
          %v710 = vsel %vm709, %v701, %v706
          %v711 = vrsqrt.pop %v508
          %v712 = vmul.f32 %v711, %v508
          %v713 = vmul.f32 %v712, %v711
          %v714 = vmul.f32 0.5, %v713
          %v715 = vsub.f32 1.5, %v714
          %v716 = vmul.f32 %v711, %v715
          %vm717 = vweird.f32 %v508
          %vm718 = vweird.f32 %v711
          %vm719 = vmor %vm717, %vm718
          %v720 = vsel %vm719, %v711, %v716
          %v721 = vrsqrt.pop %v509
          %v722 = vmul.f32 %v721, %v509
          %v723 = vmul.f32 %v722, %v721
          %v724 = vmul.f32 0.5, %v723
          %v725 = vsub.f32 1.5, %v724
          %v726 = vmul.f32 %v721, %v725
          %vm727 = vweird.f32 %v509
          %vm728 = vweird.f32 %v721
          %vm729 = vmor %vm727, %vm728
          %v730 = vsel %vm729, %v721, %v726
          %v731 = vrsqrt.pop %v510
          %v732 = vmul.f32 %v731, %v510
          %v733 = vmul.f32 %v732, %v731
          %v734 = vmul.f32 0.5, %v733
          %v735 = vsub.f32 1.5, %v734
          %v736 = vmul.f32 %v731, %v735
          %vm737 = vweird.f32 %v510
          %vm738 = vweird.f32 %v731
          %vm739 = vmor %vm737, %vm738
          %v740 = vsel %vm739, %v731, %v736
          %v741 = vrsqrt.pop %v511
          %v742 = vmul.f32 %v741, %v511
          %v743 = vmul.f32 %v742, %v741
          %v744 = vmul.f32 0.5, %v743
          %v745 = vsub.f32 1.5, %v744
          %v746 = vmul.f32 %v741, %v745
          %vm747 = vweird.f32 %v511
          %vm748 = vweird.f32 %v741
          %vm749 = vmor %vm747, %vm748
          %v750 = vsel %vm749, %v741, %v746
          %v751 = vrsqrt.pop %v512
          %v752 = vmul.f32 %v751, %v512
          %v753 = vmul.f32 %v752, %v751
          %v754 = vmul.f32 0.5, %v753
          %v755 = vsub.f32 1.5, %v754
          %v756 = vmul.f32 %v751, %v755
          %vm757 = vweird.f32 %v512
          %vm758 = vweird.f32 %v751
          %vm759 = vmor %vm757, %vm758
          %v760 = vsel %vm759, %v751, %v756
          %v761 = vrsqrt.pop %v513
          %v762 = vmul.f32 %v761, %v513
          %v763 = vmul.f32 %v762, %v761
          %v764 = vmul.f32 0.5, %v763
          %v765 = vsub.f32 1.5, %v764
          %v766 = vmul.f32 %v761, %v765
          %vm767 = vweird.f32 %v513
          %vm768 = vweird.f32 %v761
          %vm769 = vmor %vm767, %vm768
          %v770 = vsel %vm769, %v761, %v766
          %v771 = vrsqrt.pop %v514
          %v772 = vmul.f32 %v771, %v514
          %v773 = vmul.f32 %v772, %v771
          %v774 = vmul.f32 0.5, %v773
          %v775 = vsub.f32 1.5, %v774
          %v776 = vmul.f32 %v771, %v775
          %vm777 = vweird.f32 %v514
          %vm778 = vweird.f32 %v771
          %vm779 = vmor %vm777, %vm778
          %v780 = vsel %vm779, %v771, %v776
          %v781 = vrsqrt.pop %v515
          %v782 = vmul.f32 %v781, %v515
          %v783 = vmul.f32 %v782, %v781
          %v784 = vmul.f32 0.5, %v783
          %v785 = vsub.f32 1.5, %v784
          %v786 = vmul.f32 %v781, %v785
          %vm787 = vweird.f32 %v515
          %vm788 = vweird.f32 %v781
          %vm789 = vmor %vm787, %vm788
          %v790 = vsel %vm789, %v781, %v786
          %v791 = vrsqrt.pop %v516
          %v792 = vmul.f32 %v791, %v516
          %v793 = vmul.f32 %v792, %v791
          %v794 = vmul.f32 0.5, %v793
          %v795 = vsub.f32 1.5, %v794
          %v796 = vmul.f32 %v791, %v795
          %vm797 = vweird.f32 %v516
          %vm798 = vweird.f32 %v791
          %vm799 = vmor %vm797, %vm798
          %v800 = vsel %vm799, %v791, %v796
          %v801 = vrsqrt.pop %v517
          %v802 = vmul.f32 %v801, %v517
          %v803 = vmul.f32 %v802, %v801
          %v804 = vmul.f32 0.5, %v803
          %v805 = vsub.f32 1.5, %v804
          %v806 = vmul.f32 %v801, %v805
          %vm807 = vweird.f32 %v517
          %vm808 = vweird.f32 %v801
          %vm809 = vmor %vm807, %vm808
          %v810 = vsel %vm809, %v801, %v806
          %v811 = vrsqrt.pop %v518
          %v812 = vmul.f32 %v811, %v518
          %v813 = vmul.f32 %v812, %v811
          %v814 = vmul.f32 0.5, %v813
          %v815 = vsub.f32 1.5, %v814
          %v816 = vmul.f32 %v811, %v815
          %vm817 = vweird.f32 %v518
          %vm818 = vweird.f32 %v811
          %vm819 = vmor %vm817, %vm818
          %v820 = vsel %vm819, %v811, %v816
          %v821 = vrsqrt.pop %v519
          %v822 = vmul.f32 %v821, %v519
          %v823 = vmul.f32 %v822, %v821
          %v824 = vmul.f32 0.5, %v823
          %v825 = vsub.f32 1.5, %v824
          %v826 = vmul.f32 %v821, %v825
          %vm827 = vweird.f32 %v519
          %vm828 = vweird.f32 %v821
          %vm829 = vmor %vm827, %vm828
          %v830 = vsel %vm829, %v821, %v826
          %v831 = vrsqrt.pop %v520
          %v832 = vmul.f32 %v831, %v520
          %v833 = vmul.f32 %v832, %v831
          %v834 = vmul.f32 0.5, %v833
          %v835 = vsub.f32 1.5, %v834
          %v836 = vmul.f32 %v831, %v835
          %vm837 = vweird.f32 %v520
          %vm838 = vweird.f32 %v831
          %vm839 = vmor %vm837, %vm838
          %v840 = vsel %vm839, %v831, %v836
          %841 = vst.msk [vmem:[%s157] sm:$0xff] %vm452, %v530
          %842 = vst.msk [vmem:[%s157 + $0x8] sm:$0xff] %vm452, %v540
          %843 = vst.msk [vmem:[%s157 + $0x10] sm:$0xff] %vm452, %v550
          %844 = vst.msk [vmem:[%s157 + $0x18] sm:$0xff] %vm452, %v560
          %845 = vst.msk [vmem:[%s157 + $0x20] sm:$0xff] %vm452, %v570
          %846 = vst.msk [vmem:[%s157 + $0x28] sm:$0xff] %vm452, %v580
          %847 = vst.msk [vmem:[%s157 + $0x30] sm:$0xff] %vm452, %v590
          %848 = vst.msk [vmem:[%s157 + $0x38] sm:$0xff] %vm452, %v600
          %849 = vst.msk [vmem:[%s157 + $0x40] sm:$0xff] %vm452, %v610
          %850 = vst.msk [vmem:[%s157 + $0x48] sm:$0xff] %vm452, %v620
          %851 = vst.msk [vmem:[%s157 + $0x50] sm:$0xff] %vm452, %v630
          %852 = vst.msk [vmem:[%s157 + $0x58] sm:$0xff] %vm452, %v640
          %853 = vst.msk [vmem:[%s157 + $0x60] sm:$0xff] %vm452, %v650
          %854 = vst.msk [vmem:[%s157 + $0x68] sm:$0xff] %vm452, %v660
          %855 = vst.msk [vmem:[%s157 + $0x70] sm:$0xff] %vm452, %v670
          %856 = vst.msk [vmem:[%s157 + $0x78] sm:$0xff] %vm452, %v680
          %857 = vst.msk [vmem:[%s157 + $0x80] sm:$0xff] %vm452, %v690
          %858 = vst.msk [vmem:[%s157 + $0x88] sm:$0xff] %vm452, %v700
          %859 = vst.msk [vmem:[%s157 + $0x90] sm:$0xff] %vm452, %v710
          %860 = vst.msk [vmem:[%s157 + $0x98] sm:$0xff] %vm452, %v720
          %861 = vst.msk [vmem:[%s157 + $0xa0] sm:$0xff] %vm452, %v730
          %862 = vst.msk [vmem:[%s157 + $0xa8] sm:$0xff] %vm452, %v740
          %863 = vst.msk [vmem:[%s157 + $0xb0] sm:$0xff] %vm452, %v750
          %864 = vst.msk [vmem:[%s157 + $0xb8] sm:$0xff] %vm452, %v760
          %865 = vst.msk [vmem:[%s157 + $0xc0] sm:$0xff] %vm452, %v770
          %866 = vst.msk [vmem:[%s157 + $0xc8] sm:$0xff] %vm452, %v780
          %867 = vst.msk [vmem:[%s157 + $0xd0] sm:$0xff] %vm452, %v790
          %868 = vst.msk [vmem:[%s157 + $0xd8] sm:$0xff] %vm452, %v800
          %869 = vst.msk [vmem:[%s157 + $0xe0] sm:$0xff] %vm452, %v810
          %870 = vst.msk [vmem:[%s157 + $0xe8] sm:$0xff] %vm452, %v820
          %871 = vst.msk [vmem:[%s157 + $0xf0] sm:$0xff] %vm452, %v830
          %872 = vst.msk [vmem:[%s157 + $0xf8] sm:$0xff] %vm452, %v840
        $region36: #{tpu_custom_call.1} parent=23 // pred_fallthru
          _
        %s873 = smul.u32 32, %s19
        %p874 = scmp.lt.s32.totalorder %s873, 63
        %s875 = scalar_select %p874, %s873, 63
        %s876 = smul.addr %s875, 8
        %s877 = scalar_lea.vmem %s1, %s876
        // Predicated region
        $region37: #{tpu_custom_call.1} parent=23 // pred_check
          %p878 = pneg %p73
        $region38: #{tpu_custom_call.1} parent=23 // pred_check_branch
          %880 = sbr.rel (%p878) target = $region40
        $region39: #{tpu_custom_call.1} parent=23 // pred_region
          %s881 = smul.u32 32, %s19
        $region40: #{tpu_custom_call.1} parent=23 // pred_fallthru
          _
      $region24: #{tpu_custom_call.1} parent=5 // pred_fallthru
        _
      %p882 = scmp.le.s32.totalorder 2, %s10
      // Predicated region
      $region41: #{tpu_custom_call.1} parent=5 // pred_check
        %p883 = pneg %p882
      $region42: #{tpu_custom_call.1} parent=5 // pred_check_branch
        %885 = sbr.rel (%p883) target = $region44
      $region43: #{tpu_custom_call.1} parent=5 // pred_region
        %s886 = ssub.s32 %s10, 2
        // Predicated region
        $region45: #{tpu_custom_call.1} parent=43 // pred_check
          %p887 = pneg %p79
        $region46: #{tpu_custom_call.1} parent=43 // pred_check_branch
          %889 = sbr.rel (%p887) target = $region48
        $region47: #{tpu_custom_call.1} parent=43 // pred_region
          %s890 = smul.u32 32, %s21
          %p891 = scmp.lt.s32.totalorder %s890, 63
          %s892 = scalar_select %p891, %s890, 63
          %s893 = smul.addr %s892, 8
          %s894 = scalar_lea.vmem %s1, %s893
        $region48: #{tpu_custom_call.1} parent=43 // pred_fallthru
          _
      $region44: #{tpu_custom_call.1} parent=5 // pred_fallthru
        _
    $region6: #{tpu_custom_call.1} parent=1 // loop_footer
      %s14 = sadd.s32 1, %s10
    $region7: #{tpu_custom_call.1} parent=1 // loop_footer_branch
      %9 = sbr.rel target = $region3
    $region8: #{tpu_custom_call.1} parent=1 // loop_exit
      _
    %895 = vsyncpa [#allocation3], 1
    %s896 = scalar_lea.sflag [#allocation3], 1
    %897 = vsyncpa %s896, 1

</llo_original>
